<compile_context>
chip_gen: v5e
topology: v5e:2x2
jax: 0.10.0
libtpu: 0.0.40
codegen_flags: <defaults>
</compile_context>

<pallas_src>
import jax
import jax.numpy as jnp
from jax.experimental import pallas as pl
from jax.experimental.pallas import tpu as pltpu


def _round_up(n: int, m: int) -> int:
    return ((n + m - 1) // m) * m


def _vmem_capacity_bytes() -> int:
    """Physical per-core VMEM; conservative 64 MiB fallback (v7x) if query fails."""
    try:
        info = pltpu.get_tpu_info()
        cap = getattr(info, "vmem_capacity_bytes", None)
        if cap:
            return int(cap)
    except Exception:
        pass
    return 64 << 20


def residual_block_kernel(x_ref, w1_ref, b_ref, w2_ref, o_ref):
    """Fused o = relu(x @ W1t + b1) @ W2t + b2 + x on one (tm, Dp) batch tile.

    w1_ref / w2_ref are pre-transposed [D_in, D_out] bf16 tiles (VMEM-resident);
    b_ref is the fused (2, Dp) f32 bias.  Matmuls run on the MXU with bf16
    operands / f32 accumulation; all element-wise work stays in f32 on the VPU.
    """
    # layer1 (MXU) -- weights already transposed, no in-kernel XLU transpose
    h = jnp.dot(x_ref[...].astype(jnp.bfloat16), w1_ref[...],
                preferred_element_type=jnp.float32)
    # bias + ReLU in f32
    h = jnp.maximum(h + b_ref[0:1, :], 0.0)
    # layer2 (MXU)
    out = jnp.dot(h.astype(jnp.bfloat16), w2_ref[...],
                  preferred_element_type=jnp.float32)
    # bias + residual: re-read x from VMEM (cheap vld) right before the add
    out = out + b_ref[1:2, :] + x_ref[...].astype(jnp.float32)
    o_ref[...] = out.astype(o_ref.dtype)


def prepare_residual_block_params(w1, b1, w2, b2):
    """One-time (parameter-load-time) prep: transpose, pad, bf16-cast the weights.

    w1, w2: [D, D] in nn.Linear layout (out_features x in_features); b1, b2: [D].
    Returns (w1t, bias, w2t, D, Dp) where w1t/w2t are [Dp, Dp] bf16 in
    [D_in, D_out] layout and bias is [2, Dp] f32.
    """
    D = w1.shape[0]
    lane_mult = 256 if D >= 1024 else 128   # fill the 256-wide MXU only when compute-bound
    Dp = _round_up(D, lane_mult)
    f32 = jnp.float32
    pad2 = ((0, Dp - D), (0, Dp - D))
    w1t = jnp.pad(w1.T.astype(f32), pad2).astype(jnp.bfloat16)
    w2t = jnp.pad(w2.T.astype(f32), pad2).astype(jnp.bfloat16)
    bias = jnp.stack([jnp.pad(b1.astype(f32), (0, Dp - D)),
                      jnp.pad(b2.astype(f32), (0, Dp - D))], axis=0)   # (2, Dp)
    return w1t, bias, w2t, D, Dp


def residual_block_apply(x, params, *, tm=None):
    """x: [B, D]; params from prepare_residual_block_params (weights already prepped)."""
    w1t, bias, w2t, D, Dp = params
    B, Dx = x.shape
    assert Dx == D, f"feature dim mismatch: x has {Dx}, params built for {D}"

    # --- batch tile selection ---------------------------------------------
    # Big tiles amortize the ~0.35us per-step overhead and reach HBM roofline,
    # but keep >= 4 grid steps (>= 2 minimum) so x/out DMA double-buffers and
    # the "parallel" axis can shard across two TensorCores on v7x.
    if tm is None:
        target_steps = 4
        tm = min(512, max(8, _round_up(pl.cdiv(B, target_steps), 8)))
    tm = max(8, _round_up(tm, 8))
    while tm > 8 and pl.cdiv(B, tm) < 2:          # guarantee >= 2 steps when possible
        tm = max(8, _round_up(tm // 2, 8))
    Bp = _round_up(B, tm)
    grid = (Bp // tm,)

    # Zero padding is semantically inert: padded h columns are relu(0+0)=0 and
    # contribute nothing to real output columns; padded rows/cols sliced off below.
    xp = jnp.pad(x, ((0, Bp - B), (0, Dp - D)))
    x_itemsize = xp.dtype.itemsize

    # --- advisory cost estimate ---------------------------------------------
    flops = 2 * 2 * Bp * Dp * Dp                       # two tm x Dp x Dp matmuls / step
    bytes_accessed = (2 * Bp * Dp * x_itemsize         # x in + out
                      + 2 * Dp * Dp * 2                # bf16 weights
                      + 2 * Dp * 4)                    # fused bias
    cost = pl.CostEstimate(flops=flops, transcendentals=0,
                           bytes_accessed=bytes_accessed)

    # --- VMEM budget, clamped to the physical capacity of this chip ----------
    def _vmem_needed(weight_bufs):
        return (2 * weight_bufs * Dp * Dp * 2          # W1t, W2t (bf16)
                + 2 * 2 * tm * Dp * x_itemsize         # x / out tiles, double-buffered
                + 4 * tm * Dp * 4                      # f32 live intermediates headroom
                + weight_bufs * 2 * Dp * 4)            # fused bias

    cap = _vmem_capacity_bytes()

    def _run(single_buffer_weights):
        vmem_limit = int(min(cap - (8 << 20),
                             max(32 << 20,
                                 2 * _vmem_needed(1 if single_buffer_weights else 2))))
        vmem_limit = max(vmem_limit, 16 << 20)

        def _const_spec(shape):
            # Grid-invariant blocks: fetched once; single-buffer them to halve
            # their resident VMEM (falls back to the default 2 buffers if this
            # JAX build doesn't accept pipeline_mode / Buffered(1)).
            if single_buffer_weights:
                return pl.BlockSpec(shape, lambda i: (0, 0),
                                    pipeline_mode=pl.Buffered(1))
            return pl.BlockSpec(shape, lambda i: (0, 0))

        return pl.pallas_call(
            residual_block_kernel,
            out_shape=jax.ShapeDtypeStruct((Bp, Dp), x.dtype),
            grid_spec=pltpu.PrefetchScalarGridSpec(
                num_scalar_prefetch=0,
                grid=grid,
                in_specs=[
                    pl.BlockSpec((tm, Dp), lambda i: (i, 0)),   # x tile (pipelined)
                    _const_spec((Dp, Dp)),                      # W1t (resident, bf16)
                    _const_spec((2, Dp)),                       # fused b1/b2 (f32)
                    _const_spec((Dp, Dp)),                      # W2t (resident, bf16)
                ],
                out_specs=pl.BlockSpec((tm, Dp), lambda i: (i, 0)),
            ),
            compiler_params=pltpu.CompilerParams(
                dimension_semantics=("parallel",),
                vmem_limit_bytes=vmem_limit,
            ),
            cost_estimate=cost,
        )(xp, w1t, bias, w2t)

    try:
        out = _run(True)            # preferred: single-buffered resident weights
    except Exception:
        out = _run(False)           # compatibility fallback: default double buffering

    return out[:B, :D]


def residual_block(x, w1, b1, w2, b2, *, tm=None):
    """Convenience one-shot wrapper (prep + apply). Prefer preparing params once."""
    return residual_block_apply(x, prepare_residual_block_params(w1, b1, w2, b2), tm=tm)


def residual_block_ref(x, w1, b1, w2, b2):
    """Pure-JAX f32 reference matching the PyTorch module."""
    h = jnp.maximum(x @ w1.T + b1, 0.0)
    return h @ w2.T + b2 + x


def residual_block_ref_bf16(x, w1, b1, w2, b2):
    """Reference using the same bf16-operand / f32-accumulate matmul recipe as the kernel."""
    xb = x.astype(jnp.bfloat16)
    w1b = w1.astype(jnp.bfloat16)
    w2b = w2.astype(jnp.bfloat16)
    h = jnp.dot(xb, w1b.T, preferred_element_type=jnp.float32) + b1
    h = jnp.maximum(h, 0.0)
    out = jnp.dot(h.astype(jnp.bfloat16), w2b.T, preferred_element_type=jnp.float32)
    return out + b2 + x.astype(jnp.float32)


if __name__ == "__main__":
    # D multiple of 128 -> lane-dense stores; B=256 with the default tm picker
    # gives tm=64 -> grid=(4,): x/out pipeline double-buffers and v7x can shard
    # the parallel axis across both TensorCores.
    B, D = 256, 128

    key = jax.random.PRNGKey(0)
    kx, kw1, kb1, kw2, kb2 = jax.random.split(key, 5)

    # Deterministic PyTorch nn.Linear-style uniform init (bound 1/sqrt(D)).
    bound = 1.0 / jnp.sqrt(jnp.float32(D))
    x = jax.random.normal(kx, (B, D), dtype=jnp.float32)
    w1 = jax.random.uniform(kw1, (D, D), jnp.float32, -bound, bound)
    b1 = jax.random.uniform(kb1, (D,), jnp.float32, -bound, bound)
    w2 = jax.random.uniform(kw2, (D, D), jnp.float32, -bound, bound)
    b2 = jax.random.uniform(kb2, (D,), jnp.float32, -bound, bound)

    # Prepare (transpose / pad / bf16-cast) the weights ONCE, then apply.
    params = prepare_residual_block_params(w1, b1, w2, b2)
    out = residual_block_apply(x, params)
    jax.block_until_ready(out)

    assert out.shape == (B, D) and out.dtype == x.dtype

    # Tight check against a reference using the same bf16/f32 matmul recipe.
    ref_bf16 = residual_block_ref_bf16(x, w1, b1, w2, b2)
    assert jnp.allclose(out, ref_bf16, atol=1e-3, rtol=1e-3), \
        "mismatch vs bf16-matched reference"

    # Loose sanity check against the full-f32 PyTorch-equivalent reference
    # (difference is only bf16 rounding of the matmul operands).
    ref_f32 = residual_block_ref(x, w1, b1, w2, b2)
    assert jnp.allclose(out, ref_f32, atol=1e-1, rtol=1e-1), \
        "mismatch vs f32 reference"

    print("KERNEL_OK")
</pallas_src>

<mosaic_0001>
module attributes {stable_mosaic.version = 11 : i64} {
  func.func @residual_block_kernel(%arg0: i32, %arg1: memref<64x128xf32, #tpu.memory_space<vmem>>, %arg2: memref<128x128xbf16, #tpu.memory_space<vmem>>, %arg3: memref<2x128xf32, #tpu.memory_space<vmem>>, %arg4: memref<128x128xbf16, #tpu.memory_space<vmem>>, %arg5: memref<64x128xf32, #tpu.memory_space<vmem>>) attributes {dimension_semantics = [#tpu.dimension_semantics<parallel>], iteration_bounds = array<i64: 4>, scalar_prefetch = 0 : i64, scratch_operands = 0 : i64, tpu.core_type = #tpu.core_type<tc>, window_params = [{transform_indices = @transform_0, window_bounds = array<i64: 64, 128>}, {pipeline_mode = #tpu.pipeline_mode<synchronous>, transform_indices = @transform_1, window_bounds = array<i64: 128, 128>}, {pipeline_mode = #tpu.pipeline_mode<synchronous>, transform_indices = @transform_2, window_bounds = array<i64: 2, 128>}, {pipeline_mode = #tpu.pipeline_mode<synchronous>, transform_indices = @transform_3, window_bounds = array<i64: 128, 128>}, {transform_indices = @transform_4, window_bounds = array<i64: 64, 128>}]} {
    %c0 = arith.constant 0 : index
    %c0_0 = arith.constant 0 : index
    %0 = vector.load %arg1[%c0, %c0_0] : memref<64x128xf32, #tpu.memory_space<vmem>>, vector<64x128xf32>
    %1 = arith.truncf %0 : vector<64x128xf32> to vector<64x128xbf16>
    %c0_1 = arith.constant 0 : index
    %c0_2 = arith.constant 0 : index
    %2 = vector.load %arg2[%c0_1, %c0_2] : memref<128x128xbf16, #tpu.memory_space<vmem>>, vector<128x128xbf16>
    %cst = arith.constant dense<0.000000e+00> : vector<64x128xf32>
    %3 = tpu.matmul %1, %2, %cst {dimension_numbers = #tpu.dot_dimension_numbers<[1], [0], [0], [1], [0, 0, 1, 1], [], []>} : vector<64x128xbf16>, vector<128x128xbf16>, vector<64x128xf32> -> vector<64x128xf32>
    %c0_3 = arith.constant 0 : index
    %c0_4 = arith.constant 0 : index
    %4 = vector.load %arg3[%c0_3, %c0_4] : memref<2x128xf32, #tpu.memory_space<vmem>>, vector<1x128xf32>
    %5 = vector.broadcast %4 : vector<1x128xf32> to vector<64x128xf32>
    %6 = arith.addf %3, %5 : vector<64x128xf32>
    %cst_5 = arith.constant 0.000000e+00 : f32
    %7 = vector.broadcast %cst_5 : f32 to vector<64x128xf32>
    %8 = arith.maximumf %6, %7 : vector<64x128xf32>
    %9 = arith.truncf %8 : vector<64x128xf32> to vector<64x128xbf16>
    %c0_6 = arith.constant 0 : index
    %c0_7 = arith.constant 0 : index
    %10 = vector.load %arg4[%c0_6, %c0_7] : memref<128x128xbf16, #tpu.memory_space<vmem>>, vector<128x128xbf16>
    %cst_8 = arith.constant dense<0.000000e+00> : vector<64x128xf32>
    %11 = tpu.matmul %9, %10, %cst_8 {dimension_numbers = #tpu.dot_dimension_numbers<[1], [0], [0], [1], [0, 0, 1, 1], [], []>} : vector<64x128xbf16>, vector<128x128xbf16>, vector<64x128xf32> -> vector<64x128xf32>
    %c1 = arith.constant 1 : index
    %c0_9 = arith.constant 0 : index
    %12 = vector.load %arg3[%c1, %c0_9] : memref<2x128xf32, #tpu.memory_space<vmem>>, vector<1x128xf32>
    %13 = vector.broadcast %12 : vector<1x128xf32> to vector<64x128xf32>
    %14 = arith.addf %11, %13 : vector<64x128xf32>
    %c0_10 = arith.constant 0 : index
    %c0_11 = arith.constant 0 : index
    %15 = vector.load %arg1[%c0_10, %c0_11] : memref<64x128xf32, #tpu.memory_space<vmem>>, vector<64x128xf32>
    %16 = arith.addf %14, %15 : vector<64x128xf32>
    %c0_12 = arith.constant 0 : index
    %c0_13 = arith.constant 0 : index
    %17 = vector.load %arg5[%c0_12, %c0_13] : memref<64x128xf32, #tpu.memory_space<vmem>>, vector<64x128xf32>
    tpu.vector_store %arg5[%c0_12, %c0_13], %16 {strides = array<i32>} : memref<64x128xf32, #tpu.memory_space<vmem>>, vector<64x128xf32>,
    return
  }
  func.func @transform_0(%arg0: i32) -> (i32, i32) {
    %c0_i32 = arith.constant 0 : i32
    %c0_i32_0 = arith.constant 0 : i32
    return %arg0, %c0_i32 : i32, i32
  }
  func.func @transform_1(%arg0: i32) -> (i32, i32) {
    %c0_i32 = arith.constant 0 : i32
    %c0_i32_0 = arith.constant 0 : i32
    %c0_i32_1 = arith.constant 0 : i32
    return %c0_i32, %c0_i32_0 : i32, i32
  }
  func.func @transform_2(%arg0: i32) -> (i32, i32) {
    %c0_i32 = arith.constant 0 : i32
    %c0_i32_0 = arith.constant 0 : i32
    %c0_i32_1 = arith.constant 0 : i32
    return %c0_i32, %c0_i32_0 : i32, i32
  }
  func.func @transform_3(%arg0: i32) -> (i32, i32) {
    %c0_i32 = arith.constant 0 : i32
    %c0_i32_0 = arith.constant 0 : i32
    %c0_i32_1 = arith.constant 0 : i32
    return %c0_i32, %c0_i32_0 : i32, i32
  }
  func.func @transform_4(%arg0: i32) -> (i32, i32) {
    %c0_i32 = arith.constant 0 : i32
    %c0_i32_0 = arith.constant 0 : i32
    return %arg0, %c0_i32 : i32, i32
  }
}

module attributes {stable_mosaic.version = 11 : i64} {
  func.func @residual_block_kernel(%arg0: i32, %arg1: memref<64x128xf32, #tpu.memory_space<vmem>>, %arg2: memref<128x128xbf16, #tpu.memory_space<vmem>>, %arg3: memref<2x128xf32, #tpu.memory_space<vmem>>, %arg4: memref<128x128xbf16, #tpu.memory_space<vmem>>, %arg5: memref<64x128xf32, #tpu.memory_space<vmem>>) attributes {dimension_semantics = [#tpu.dimension_semantics<parallel>], iteration_bounds = array<i64: 4>, scalar_prefetch = 0 : i64, scratch_operands = 0 : i64, tpu.core_type = #tpu.core_type<tc>, window_params = [{transform_indices = @transform_0, window_bounds = array<i64: 64, 128>}, {pipeline_mode = #tpu.pipeline_mode<synchronous>, transform_indices = @transform_1, window_bounds = array<i64: 128, 128>}, {pipeline_mode = #tpu.pipeline_mode<synchronous>, transform_indices = @transform_2, window_bounds = array<i64: 2, 128>}, {pipeline_mode = #tpu.pipeline_mode<synchronous>, transform_indices = @transform_3, window_bounds = array<i64: 128, 128>}, {transform_indices = @transform_4, window_bounds = array<i64: 64, 128>}]} {
    %c0 = arith.constant 0 : index
    %c0_0 = arith.constant 0 : index
    %0 = vector.load %arg1[%c0, %c0_0] : memref<64x128xf32, #tpu.memory_space<vmem>>, vector<64x128xf32>
    %1 = arith.truncf %0 : vector<64x128xf32> to vector<64x128xbf16>
    %c0_1 = arith.constant 0 : index
    %c0_2 = arith.constant 0 : index
    %2 = vector.load %arg2[%c0_1, %c0_2] : memref<128x128xbf16, #tpu.memory_space<vmem>>, vector<128x128xbf16>
    %cst = arith.constant dense<0.000000e+00> : vector<64x128xf32>
    %3 = tpu.matmul %1, %2, %cst {dimension_numbers = #tpu.dot_dimension_numbers<[1], [0], [0], [1], [0, 0, 1, 1], [], []>} : vector<64x128xbf16>, vector<128x128xbf16>, vector<64x128xf32> -> vector<64x128xf32>
    %c0_3 = arith.constant 0 : index
    %c0_4 = arith.constant 0 : index
    %4 = vector.load %arg3[%c0_3, %c0_4] : memref<2x128xf32, #tpu.memory_space<vmem>>, vector<1x128xf32>
    %5 = vector.broadcast %4 : vector<1x128xf32> to vector<64x128xf32>
    %6 = arith.addf %3, %5 : vector<64x128xf32>
    %cst_5 = arith.constant 0.000000e+00 : f32
    %7 = vector.broadcast %cst_5 : f32 to vector<64x128xf32>
    %8 = arith.maximumf %6, %7 : vector<64x128xf32>
    %9 = arith.truncf %8 : vector<64x128xf32> to vector<64x128xbf16>
    %c0_6 = arith.constant 0 : index
    %c0_7 = arith.constant 0 : index
    %10 = vector.load %arg4[%c0_6, %c0_7] : memref<128x128xbf16, #tpu.memory_space<vmem>>, vector<128x128xbf16>
    %cst_8 = arith.constant dense<0.000000e+00> : vector<64x128xf32>
    %11 = tpu.matmul %9, %10, %cst_8 {dimension_numbers = #tpu.dot_dimension_numbers<[1], [0], [0], [1], [0, 0, 1, 1], [], []>} : vector<64x128xbf16>, vector<128x128xbf16>, vector<64x128xf32> -> vector<64x128xf32>
    %c1 = arith.constant 1 : index
    %c0_9 = arith.constant 0 : index
    %12 = vector.load %arg3[%c1, %c0_9] : memref<2x128xf32, #tpu.memory_space<vmem>>, vector<1x128xf32>
    %13 = vector.broadcast %12 : vector<1x128xf32> to vector<64x128xf32>
    %14 = arith.addf %11, %13 : vector<64x128xf32>
    %c0_10 = arith.constant 0 : index
    %c0_11 = arith.constant 0 : index
    %15 = vector.load %arg1[%c0_10, %c0_11] : memref<64x128xf32, #tpu.memory_space<vmem>>, vector<64x128xf32>
    %16 = arith.addf %14, %15 : vector<64x128xf32>
    %c0_12 = arith.constant 0 : index
    %c0_13 = arith.constant 0 : index
    %17 = vector.load %arg5[%c0_12, %c0_13] : memref<64x128xf32, #tpu.memory_space<vmem>>, vector<64x128xf32>
    tpu.vector_store %arg5[%c0_12, %c0_13], %16 {strides = array<i32>} : memref<64x128xf32, #tpu.memory_space<vmem>>, vector<64x128xf32>,
    return
  }
  func.func @transform_0(%arg0: i32) -> (i32, i32) {
    %c0_i32 = arith.constant 0 : i32
    %c0_i32_0 = arith.constant 0 : i32
    return %arg0, %c0_i32 : i32, i32
  }
  func.func @transform_1(%arg0: i32) -> (i32, i32) {
    %c0_i32 = arith.constant 0 : i32
    %c0_i32_0 = arith.constant 0 : i32
    %c0_i32_1 = arith.constant 0 : i32
    return %c0_i32, %c0_i32_0 : i32, i32
  }
  func.func @transform_2(%arg0: i32) -> (i32, i32) {
    %c0_i32 = arith.constant 0 : i32
    %c0_i32_0 = arith.constant 0 : i32
    %c0_i32_1 = arith.constant 0 : i32
    return %c0_i32, %c0_i32_0 : i32, i32
  }
  func.func @transform_3(%arg0: i32) -> (i32, i32) {
    %c0_i32 = arith.constant 0 : i32
    %c0_i32_0 = arith.constant 0 : i32
    %c0_i32_1 = arith.constant 0 : i32
    return %c0_i32, %c0_i32_0 : i32, i32
  }
  func.func @transform_4(%arg0: i32) -> (i32, i32) {
    %c0_i32 = arith.constant 0 : i32
    %c0_i32_0 = arith.constant 0 : i32
    return %arg0, %c0_i32 : i32, i32
  }
}

</mosaic_0001>

<llo_original>
// kernel: tpu_custom_call.1
$region0: #{tpu_custom_call.1}
  #allocation0 [shape = 'u32[]', space=smem, size = 0x4, offset = 0x4, fixed_abs, tag = 'smem constant byte address 0x4 - core index']
  #allocation1 [shape = 'u32[72,128]{1,0:T(1,128)}', space=vmem, size = 0x9000, scoped, tag = 'internal scratch']
  %s0 = inlined_call_operand.hbm [shape: f32[256,128], index: 0, kind: input, shape index: {}]
  %s1 = inlined_call_operand.hbm [shape: bf16[128,128], index: 1, kind: input, shape index: {}]
  %s2 = inlined_call_operand.hbm [shape: f32[2,128], index: 2, kind: input, shape index: {}]
  %s3 = inlined_call_operand.hbm [shape: bf16[128,128], index: 3, kind: input, shape index: {}]
  %s4 = inlined_call_operand.hbm [shape: f32[256,128], index: 4, kind: output, shape index: {}]
  %s5 = sld [smem:[#allocation0]]
  $region65: #{tpu_custom_call.1} parent=0
    _
  %s7 = ssub.s32 1, %s5
  %s8 = scalar_select 0, %s7, %s5
  $region1: #{tpu_custom_call.1} parent=0
    #allocation2 [shape = 'u8[65536]{0}', space=vmem, size = 0x10000, scoped, tag = 'input window, operand 0']
    #allocation3 [shape = 's32[2]{0}', space=sflag, size = 0x8, scoped, tag = 'scoped memory for tpu_custom_call.1']
    #allocation4 [shape = 's32[2]{0}', space=sflag, size = 0x8, scoped, tag = 'scoped memory for tpu_custom_call.1']
    #allocation5 [shape = 'u8[32768]{0}', space=vmem, size = 0x8000, scoped, tag = 'input window, operand 1, single buffered']
    #allocation6 [shape = 's32[1]{0}', space=sflag, size = 0x4, scoped, tag = 'scoped memory for tpu_custom_call.1']
    #allocation7 [shape = 'u8[1024]{0}', space=vmem, size = 0x400, scoped, tag = 'input window, operand 2, single buffered']
    #allocation8 [shape = 'u8[32768]{0}', space=vmem, size = 0x8000, scoped, tag = 'input window, operand 3, single buffered']
    #allocation9 [shape = 's32[1]{0}', space=sflag, size = 0x4, scoped, tag = 'scoped memory for tpu_custom_call.1']
    #allocation10 [shape = 'u8[65536]{0}', space=vmem, size = 0x10000, scoped, tag = 'output window, operand 0']
    %9 = vsyncpa [#allocation3], 0
    %s10 = scalar_lea.sflag [#allocation3], 1
    %11 = vsyncpa %s10, 0
    %12 = vsyncpa [#allocation6], 0
    %13 = vsyncpa [#allocation9], 0
    %14 = vsyncpa [#allocation4], 0
    %s15 = scalar_lea.sflag [#allocation4], 1
    %16 = vsyncpa %s15, 0
    loop: start=0, step=1, limit=6
    $region2: #{tpu_custom_call.1} parent=1 // loop_pre_header
      _
    $region3: #{tpu_custom_call.1} parent=1 // loop_header
      %s18 = sphi 0, %s22
      %p19 = scmp.ge.s32.totalorder %s18, 6
      %s28 = sphi 0, %s30
      %s31 = sphi 0, %s28
      %s32 = sphi 0, %s31
      %s48 = sphi 0, %s32
      %s52 = sphi 0, %s52
      %s54 = sphi 0, %s52
      %s55 = sphi 0, %s54
      %s69 = sphi 0, %s55
      %s73 = sphi 0, %s73
      %s75 = sphi 0, %s73
      %s76 = sphi 0, %s75
      %s90 = sphi 0, %s76
      %s94 = sphi 0, %s94
      %s96 = sphi 0, %s94
      %s97 = sphi 0, %s96
      %s111 = sphi 0, %s97
      %s117 = sphi 0, %s119
      %s120 = sphi 0, %s117
      %s121 = sphi 0, %s120
      %s137 = sphi 0, %s121
    $region4: #{tpu_custom_call.1} parent=1 // loop_header_branch
      %21 = sbr.rel (%p19) target = $region8
    $region5: #{tpu_custom_call.1} parent=1 // loop_body
      %s23 = ssub.s32 %s18, 1
      %s24 = ssub.s32 %s18, 2
      %s25 = sadd.s32 %s18, 1
      %s26 = ssub.s32 %s18, %s25
      %p27 = scmp.eq.s32.totalorder %s26, 0
      %s29 = sadd.s32 %s28, 1
      %s30 = scalar_select %p27, %s28, %s29
      %p33 = pneg %p27
      %p34 = scmp.eq.s32.totalorder %s18, 3
      %p35 = por %p33, %p34
      %p36 = scmp.ne.s32.totalorder %s28, %s31
      %p37 = scmp.eq.s32.totalorder %s18, 0
      %p38 = por %p36, %p37
      %p39 = scmp.ne.s32.totalorder %s28, %s31
      %p40 = scmp.eq.s32.totalorder %s23, 3
      %p41 = por %p39, %p40
      %p42 = scmp.ne.s32.totalorder %s31, %s32
      %p43 = scmp.eq.s32.totalorder %s23, 0
      %p44 = por %p42, %p43
      %p45 = scmp.ne.s32.totalorder %s31, %s32
      %p46 = scmp.eq.s32.totalorder %s24, 3
      %p47 = por %p45, %p46
      %p49 = scmp.ne.s32.totalorder %s32, %s48
      %p50 = scmp.eq.s32.totalorder %s24, 0
      %p51 = por %p49, %p50
      %s53 = sadd.s32 %s52, 1
      %p56 = scmp.eq.s32.totalorder %s18, 3
      %p57 = scmp.ne.s32.totalorder %s52, %s54
      %p58 = scmp.eq.s32.totalorder %s18, 0
      %p59 = por %p57, %p58
      %p60 = scmp.ne.s32.totalorder %s52, %s54
      %p61 = scmp.eq.s32.totalorder %s23, 3
      %p62 = por %p60, %p61
      %p63 = scmp.ne.s32.totalorder %s54, %s55
      %p64 = scmp.eq.s32.totalorder %s23, 0
      %p65 = por %p63, %p64
      %p66 = scmp.ne.s32.totalorder %s54, %s55
      %p67 = scmp.eq.s32.totalorder %s24, 3
      %p68 = por %p66, %p67
      %p70 = scmp.ne.s32.totalorder %s55, %s69
      %p71 = scmp.eq.s32.totalorder %s24, 0
      %p72 = por %p70, %p71
      %s74 = sadd.s32 %s73, 1
      %p77 = scmp.eq.s32.totalorder %s18, 3
      %p78 = scmp.ne.s32.totalorder %s73, %s75
      %p79 = scmp.eq.s32.totalorder %s18, 0
      %p80 = por %p78, %p79
      %p81 = scmp.ne.s32.totalorder %s73, %s75
      %p82 = scmp.eq.s32.totalorder %s23, 3
      %p83 = por %p81, %p82
      %p84 = scmp.ne.s32.totalorder %s75, %s76
      %p85 = scmp.eq.s32.totalorder %s23, 0
      %p86 = por %p84, %p85
      %p87 = scmp.ne.s32.totalorder %s75, %s76
      %p88 = scmp.eq.s32.totalorder %s24, 3
      %p89 = por %p87, %p88
      %p91 = scmp.ne.s32.totalorder %s76, %s90
      %p92 = scmp.eq.s32.totalorder %s24, 0
      %p93 = por %p91, %p92
      %s95 = sadd.s32 %s94, 1
      %p98 = scmp.eq.s32.totalorder %s18, 3
      %p99 = scmp.ne.s32.totalorder %s94, %s96
      %p100 = scmp.eq.s32.totalorder %s18, 0
      %p101 = por %p99, %p100
      %p102 = scmp.ne.s32.totalorder %s94, %s96
      %p103 = scmp.eq.s32.totalorder %s23, 3
      %p104 = por %p102, %p103
      %p105 = scmp.ne.s32.totalorder %s96, %s97
      %p106 = scmp.eq.s32.totalorder %s23, 0
      %p107 = por %p105, %p106
      %p108 = scmp.ne.s32.totalorder %s96, %s97
      %p109 = scmp.eq.s32.totalorder %s24, 3
      %p110 = por %p108, %p109
      %p112 = scmp.ne.s32.totalorder %s97, %s111
      %p113 = scmp.eq.s32.totalorder %s24, 0
      %p114 = por %p112, %p113
      %s115 = ssub.s32 %s18, %s25
      %p116 = scmp.eq.s32.totalorder %s115, 0
      %s118 = sadd.s32 %s117, 1
      %s119 = scalar_select %p116, %s117, %s118
      %p122 = pneg %p116
      %p123 = scmp.eq.s32.totalorder %s18, 3
      %p124 = por %p122, %p123
      %p125 = scmp.ne.s32.totalorder %s117, %s120
      %p126 = scmp.eq.s32.totalorder %s18, 0
      %p127 = por %p125, %p126
      %p128 = scmp.ne.s32.totalorder %s117, %s120
      %p129 = scmp.eq.s32.totalorder %s23, 3
      %p130 = por %p128, %p129
      %p131 = scmp.ne.s32.totalorder %s120, %s121
      %p132 = scmp.eq.s32.totalorder %s23, 0
      %p133 = por %p131, %p132
      %p134 = scmp.ne.s32.totalorder %s120, %s121
      %p135 = scmp.eq.s32.totalorder %s24, 3
      %p136 = por %p134, %p135
      %p138 = scmp.ne.s32.totalorder %s121, %s137
      %p139 = scmp.eq.s32.totalorder %s24, 0
      %p140 = por %p138, %p139
      %p141 = scmp.le.s32.totalorder 1, %s18
      %p142 = scmp.lt.s32.totalorder %s18, 5
      %p143 = pnand %p141, %p142
      %p144 = pneg %p143
      // Predicated region
      $region9: #{tpu_custom_call.1} parent=5 // pred_check
        _
      $region10: #{tpu_custom_call.1} parent=5 // pred_check_branch
        %146 = sbr.rel (%p143) target = $region12
      $region11: #{tpu_custom_call.1} parent=5 // pred_region
        %s147 = ssub.s32 %s18, 1
        // Predicated region
        $region13: #{tpu_custom_call.1} parent=11 // pred_check
          %p148 = pneg %p65
        $region14: #{tpu_custom_call.1} parent=11 // pred_check_branch
          %150 = sbr.rel (%p148) target = $region16
        $region15: #{tpu_custom_call.1} parent=11 // pred_region
          %152 = vsyncadd [#allocation6], 0
          %s153 = sshll.u32 %s1, 4
          %s154 = int_to_ptr.hbm [resolvable:$true] %s153
          %s155 = sshll.u32 [#allocation5], 4
          %s156 = int_to_ptr.vmem [resolvable:$true] %s155
          %161 = dma.hbm_to_vmem [thread:$0]  %s154, 1024, %s156, [#allocation6], 64, 64, 4
        $region16: #{tpu_custom_call.1} parent=11 // pred_fallthru
          _
        // Predicated region
        $region17: #{tpu_custom_call.1} parent=11 // pred_check
          %p162 = pneg %p86
        $region18: #{tpu_custom_call.1} parent=11 // pred_check_branch
          %164 = sbr.rel (%p162) target = $region20
        $region19: #{tpu_custom_call.1} parent=11 // pred_region
          %166 = vsyncadd [#allocation6], 0
          %s168 = sshll.u32 %s2, 4
          %s169 = int_to_ptr.hbm [resolvable:$true] %s168
          %s170 = sshll.u32 [#allocation7], 4
          %s171 = int_to_ptr.vmem [resolvable:$true] %s170
          %173 = dma.hbm_to_vmem [thread:$0]  %s169, 32, %s171, [#allocation6]
        $region20: #{tpu_custom_call.1} parent=11 // pred_fallthru
          _
        // Predicated region
        $region21: #{tpu_custom_call.1} parent=11 // pred_check
          %p174 = pneg %p107
        $region22: #{tpu_custom_call.1} parent=11 // pred_check_branch
          %176 = sbr.rel (%p174) target = $region24
        $region23: #{tpu_custom_call.1} parent=11 // pred_region
          %178 = vsyncadd [#allocation9], 0
          %s179 = sshll.u32 %s3, 4
          %s180 = int_to_ptr.hbm [resolvable:$true] %s179
          %s181 = sshll.u32 [#allocation8], 4
          %s182 = int_to_ptr.vmem [resolvable:$true] %s181
          %187 = dma.hbm_to_vmem [thread:$0]  %s180, 1024, %s182, [#allocation9], 64, 64, 4
        $region24: #{tpu_custom_call.1} parent=11 // pred_fallthru
          _
      $region12: #{tpu_custom_call.1} parent=5 // pred_fallthru
        _
      %p188 = scmp.lt.s32.totalorder %s18, 4
      // Predicated region
      $region25: #{tpu_custom_call.1} parent=5 // pred_check
        %p189 = pneg %p188
      $region26: #{tpu_custom_call.1} parent=5 // pred_check_branch
        %191 = sbr.rel (%p189) target = $region28
      $region27: #{tpu_custom_call.1} parent=5 // pred_region
        // Predicated region
        $region29: #{tpu_custom_call.1} parent=27 // pred_check
          %p192 = pneg %p38
        $region30: #{tpu_custom_call.1} parent=27 // pred_check_branch
          %194 = sbr.rel (%p192) target = $region32
        $region31: #{tpu_custom_call.1} parent=27 // pred_region
          %s195 = sand.u32 %s28, 1
          %s196 = scalar_lea.sflag [#allocation3], %s195
          %s197 = sand.u32 %s28, 1
          %s198 = smul.addr %s197, 64
          %s199 = scalar_lea.vmem [#allocation2], %s198
          %s200 = smul.u32 8, %s18
          %202 = vsyncadd %s196, 0
          %s203 = smul.addr %s200, 8
          %s204 = scalar_lea.hbm %s0, %s203
          %s205 = sshll.u32 %s204, 4
          %s206 = int_to_ptr.hbm [resolvable:$true] %s205
          %s207 = sshll.u32 %s199, 4
          %s208 = int_to_ptr.vmem [resolvable:$true] %s207
          %213 = dma.hbm_to_vmem [thread:$0]  %s206, 1024, %s208, %s196, 128, 128, 8
        $region32: #{tpu_custom_call.1} parent=27 // pred_fallthru
          _
      $region28: #{tpu_custom_call.1} parent=5 // pred_fallthru
        _
      %p214 = scmp.le.s32.totalorder 1, %s18
      %p215 = scmp.lt.s32.totalorder %s18, 5
      %p216 = pnand %p214, %p215
      %p217 = pneg %p216
      // Predicated region
      $region33: #{tpu_custom_call.1} parent=5 // pred_check
        _
      $region34: #{tpu_custom_call.1} parent=5 // pred_check_branch
        %219 = sbr.rel (%p216) target = $region36
      $region35: #{tpu_custom_call.1} parent=5 // pred_region
        %s220 = ssub.s32 %s18, 1
        %s221 = sand.u32 %s31, 1
        %s222 = scalar_lea.sflag [#allocation3], %s221
        %s223 = sand.u32 %s31, 1
        %s224 = smul.addr %s223, 64
        %s225 = scalar_lea.vmem [#allocation2], %s224
        // Predicated region
        $region37: #{tpu_custom_call.1} parent=35 // pred_check
          %p226 = pneg %p44
        $region38: #{tpu_custom_call.1} parent=35 // pred_check_branch
          %228 = sbr.rel (%p226) target = $region40
        $region39: #{tpu_custom_call.1} parent=35 // pred_region
          %230 = dma.done %s222, 1024
        $region40: #{tpu_custom_call.1} parent=35 // pred_fallthru
          _
        // Predicated region
        $region41: #{tpu_custom_call.1} parent=35 // pred_check
          %p231 = pneg %p65
        $region42: #{tpu_custom_call.1} parent=35 // pred_check_branch
          %233 = sbr.rel (%p231) target = $region44
        $region43: #{tpu_custom_call.1} parent=35 // pred_region
          %235 = dma.done [#allocation6], 1024
        $region44: #{tpu_custom_call.1} parent=35 // pred_fallthru
          _
        // Predicated region
        $region45: #{tpu_custom_call.1} parent=35 // pred_check
          %p236 = pneg %p86
        $region46: #{tpu_custom_call.1} parent=35 // pred_check_branch
          %238 = sbr.rel (%p236) target = $region48
        $region47: #{tpu_custom_call.1} parent=35 // pred_region
          %240 = dma.done [#allocation6], 32
        $region48: #{tpu_custom_call.1} parent=35 // pred_fallthru
          _
        // Predicated region
        $region49: #{tpu_custom_call.1} parent=35 // pred_check
          %p241 = pneg %p107
        $region50: #{tpu_custom_call.1} parent=35 // pred_check_branch
          %243 = sbr.rel (%p241) target = $region52
        $region51: #{tpu_custom_call.1} parent=35 // pred_region
          %245 = dma.done [#allocation9], 1024
        $region52: #{tpu_custom_call.1} parent=35 // pred_fallthru
          _
        %s246 = sand.u32 %s31, 1
        %s247 = scalar_lea.sflag [#allocation3], %s246
        %s248 = sand.u32 %s31, 1
        %s249 = smul.addr %s248, 64
        %s250 = scalar_lea.vmem [#allocation2], %s249
        %p251 = pneg %p44
        %p252 = pneg %p41
        %p253 = pneg %p65
        %p254 = pneg %p62
        %p255 = pneg %p86
        %p256 = pneg %p83
        %p257 = pneg %p107
        %p258 = pneg %p104
        %p259 = pneg %p133
        %p260 = pneg %p130
        %s261 = sand.u32 %s120, 1
        %s262 = scalar_lea.sflag [#allocation4], %s261
        %s263 = sand.u32 %s120, 1
        %s264 = smul.addr %s263, 64
        %s265 = scalar_lea.vmem [#allocation10], %s264
        %s266 = smul.u32 8, %s23
        %s267 = smul.u32 8, %s23
        %v268 = vld [vmem:[%s225] sm:$0xff]
        %v269 = vld [vmem:[%s225 + $0x8] sm:$0xff]
        %v270 = vld [vmem:[%s225 + $0x10] sm:$0xff]
        %v271 = vld [vmem:[%s225 + $0x18] sm:$0xff]
        %v272 = vld [vmem:[%s225 + $0x20] sm:$0xff]
        %v273 = vld [vmem:[%s225 + $0x28] sm:$0xff]
        %v274 = vld [vmem:[%s225 + $0x30] sm:$0xff]
        %v275 = vld [vmem:[%s225 + $0x38] sm:$0xff]
        %v276 = vpack.c.bf16 %v269, %v268
        %v277 = vpack.c.bf16 %v271, %v270
        %v278 = vpack.c.bf16 %v273, %v272
        %v279 = vpack.c.bf16 %v275, %v274
        %v280 = vld [vmem:[#allocation5] sm:$0xf]
        %v281 = vld [vmem:[#allocation5 + $0x4] sm:$0xf]
        %v282 = vld [vmem:[#allocation5 + $0x8] sm:$0xf]
        %v283 = vld [vmem:[#allocation5 + $0xc] sm:$0xf]
        %v284 = vld [vmem:[#allocation5 + $0x10] sm:$0xf]
        %v285 = vld [vmem:[#allocation5 + $0x14] sm:$0xf]
        %v286 = vld [vmem:[#allocation5 + $0x18] sm:$0xf]
        %v287 = vld [vmem:[#allocation5 + $0x1c] sm:$0xf]
        %v288 = vld [vmem:[#allocation5 + $0x20] sm:$0xf]
        %v289 = vld [vmem:[#allocation5 + $0x24] sm:$0xf]
        %v290 = vld [vmem:[#allocation5 + $0x28] sm:$0xf]
        %v291 = vld [vmem:[#allocation5 + $0x2c] sm:$0xf]
        %v292 = vld [vmem:[#allocation5 + $0x30] sm:$0xf]
        %v293 = vld [vmem:[#allocation5 + $0x34] sm:$0xf]
        %v294 = vld [vmem:[#allocation5 + $0x38] sm:$0xf]
        %v295 = vld [vmem:[#allocation5 + $0x3c] sm:$0xf]
        %v296 = vld [vmem:[#allocation7] sm:$0x1]
        %v297 = vperm.slane %v296, 0
        %v314 = vunpack.c.l.b16 %v280
        %v315 = vunpack.c.l.b16 %v281
        %v316 = vunpack.c.l.b16 %v282
        %v317 = vunpack.c.l.b16 %v283
        %v318 = vunpack.c.l.b16 %v284
        %v319 = vunpack.c.l.b16 %v285
        %v320 = vunpack.c.l.b16 %v286
        %v321 = vunpack.c.l.b16 %v287
        %v322 = vunpack.c.l.b16 %v288
        %v323 = vunpack.c.l.b16 %v289
        %v324 = vunpack.c.l.b16 %v290
        %v325 = vunpack.c.l.b16 %v291
        %v326 = vunpack.c.l.b16 %v292
        %v327 = vunpack.c.l.b16 %v293
        %v328 = vunpack.c.l.b16 %v294
        %v329 = vunpack.c.l.b16 %v295
        %v330 = vpack.c.b16 %v315, %v314
        %v331 = vpack.c.b16 %v317, %v316
        %v332 = vpack.c.b16 %v319, %v318
        %v333 = vpack.c.b16 %v321, %v320
        %v334 = vpack.c.b16 %v323, %v322
        %v335 = vpack.c.b16 %v325, %v324
        %v336 = vpack.c.b16 %v327, %v326
        %v337 = vpack.c.b16 %v329, %v328
        %346 = vmatpush.bf16.msra.mxu0 %v337
        %347 = vmatpush.bf16.msra.mxu0 %v336
        %348 = vmatpush.bf16.msra.mxu0 %v335
        %349 = vmatpush.bf16.msra.mxu0 %v334
        %350 = vmatpush.bf16.msra.mxu0 %v333
        %351 = vmatpush.bf16.msra.mxu0 %v332
        %352 = vmatpush.bf16.msra.mxu0 %v331
        %353 = vmatpush.bf16.msra.mxu0 %v330
        %354 = vmatmul.bf16.gmra.mxu0 %v276
        %v355 = vpop.f32.mrf.mxu0
        %v356 = vadd.f32 %v297, %v355
        %v357 = vpop.f32.mrf.mxu0
        %v358 = vadd.f32 %v297, %v357
        %359 = vmatmul.bf16.gmra.mxu0 %v277
        %v360 = vpop.f32.mrf.mxu0
        %v361 = vadd.f32 %v297, %v360
        %v362 = vpop.f32.mrf.mxu0
        %v363 = vadd.f32 %v297, %v362
        %364 = vmatmul.bf16.gmra.mxu0 %v278
        %v365 = vpop.f32.mrf.mxu0
        %v366 = vadd.f32 %v297, %v365
        %v367 = vpop.f32.mrf.mxu0
        %v368 = vadd.f32 %v297, %v367
        %369 = vmatmul.bf16.gmra.mxu0 %v279
        %v370 = vpop.f32.mrf.mxu0
        %v371 = vadd.f32 %v297, %v370
        %v372 = vpop.f32.mrf.mxu0
        %v373 = vadd.f32 %v297, %v372
        %374 = vdwg.mxu0
        %v375 = vmax.f32 %v356, 0.0
        %v376 = vmax.f32 %v358, 0.0
        %v377 = vmax.f32 %v361, 0.0
        %v378 = vmax.f32 %v363, 0.0
        %v379 = vmax.f32 %v366, 0.0
        %v380 = vmax.f32 %v368, 0.0
        %v381 = vmax.f32 %v371, 0.0
        %v382 = vmax.f32 %v373, 0.0
        %v383 = vpack.c.bf16 %v376, %v375
        %v384 = vpack.c.bf16 %v378, %v377
        %v385 = vpack.c.bf16 %v380, %v379
        %v386 = vpack.c.bf16 %v382, %v381
        %v387 = vld [vmem:[#allocation8] sm:$0xf]
        %v388 = vld [vmem:[#allocation8 + $0x4] sm:$0xf]
        %v389 = vld [vmem:[#allocation8 + $0x8] sm:$0xf]
        %v390 = vld [vmem:[#allocation8 + $0xc] sm:$0xf]
        %v391 = vld [vmem:[#allocation8 + $0x10] sm:$0xf]
        %v392 = vld [vmem:[#allocation8 + $0x14] sm:$0xf]
        %v393 = vld [vmem:[#allocation8 + $0x18] sm:$0xf]
        %v394 = vld [vmem:[#allocation8 + $0x1c] sm:$0xf]
        %v395 = vld [vmem:[#allocation8 + $0x20] sm:$0xf]
        %v396 = vld [vmem:[#allocation8 + $0x24] sm:$0xf]
        %v397 = vld [vmem:[#allocation8 + $0x28] sm:$0xf]
        %v398 = vld [vmem:[#allocation8 + $0x2c] sm:$0xf]
        %v399 = vld [vmem:[#allocation8 + $0x30] sm:$0xf]
        %v400 = vld [vmem:[#allocation8 + $0x34] sm:$0xf]
        %v401 = vld [vmem:[#allocation8 + $0x38] sm:$0xf]
        %v402 = vld [vmem:[#allocation8 + $0x3c] sm:$0xf]
        %v403 = vld [vmem:[#allocation7 + $0x1] sm:$0x1]
        %v404 = vperm.slane %v403, 0
        %v421 = vunpack.c.l.b16 %v387
        %v422 = vunpack.c.l.b16 %v388
        %v423 = vunpack.c.l.b16 %v389
        %v424 = vunpack.c.l.b16 %v390
        %v425 = vunpack.c.l.b16 %v391
        %v426 = vunpack.c.l.b16 %v392
        %v427 = vunpack.c.l.b16 %v393
        %v428 = vunpack.c.l.b16 %v394
        %v429 = vunpack.c.l.b16 %v395
        %v430 = vunpack.c.l.b16 %v396
        %v431 = vunpack.c.l.b16 %v397
        %v432 = vunpack.c.l.b16 %v398
        %v433 = vunpack.c.l.b16 %v399
        %v434 = vunpack.c.l.b16 %v400
        %v435 = vunpack.c.l.b16 %v401
        %v436 = vunpack.c.l.b16 %v402
        %v437 = vpack.c.b16 %v422, %v421
        %v438 = vpack.c.b16 %v424, %v423
        %v439 = vpack.c.b16 %v426, %v425
        %v440 = vpack.c.b16 %v428, %v427
        %v441 = vpack.c.b16 %v430, %v429
        %v442 = vpack.c.b16 %v432, %v431
        %v443 = vpack.c.b16 %v434, %v433
        %v444 = vpack.c.b16 %v436, %v435
        %453 = vmatpush.bf16.msra.mxu0 %v444
        %454 = vmatpush.bf16.msra.mxu0 %v443
        %455 = vmatpush.bf16.msra.mxu0 %v442
        %456 = vmatpush.bf16.msra.mxu0 %v441
        %457 = vmatpush.bf16.msra.mxu0 %v440
        %458 = vmatpush.bf16.msra.mxu0 %v439
        %459 = vmatpush.bf16.msra.mxu0 %v438
        %460 = vmatpush.bf16.msra.mxu0 %v437
        %461 = vmatmul.bf16.gmra.mxu0 %v383
        %v462 = vpop.f32.mrf.mxu0
        %v463 = vadd.f32 %v404, %v462
        %v464 = vpop.f32.mrf.mxu0
        %v465 = vadd.f32 %v404, %v464
        %466 = vmatmul.bf16.gmra.mxu0 %v384
        %v467 = vpop.f32.mrf.mxu0
        %v468 = vadd.f32 %v404, %v467
        %v469 = vpop.f32.mrf.mxu0
        %v470 = vadd.f32 %v404, %v469
        %471 = vmatmul.bf16.gmra.mxu0 %v385
        %v472 = vpop.f32.mrf.mxu0
        %v473 = vadd.f32 %v404, %v472
        %v474 = vpop.f32.mrf.mxu0
        %v475 = vadd.f32 %v404, %v474
        %476 = vmatmul.bf16.gmra.mxu0 %v386
        %v477 = vpop.f32.mrf.mxu0
        %v478 = vadd.f32 %v404, %v477
        %v479 = vpop.f32.mrf.mxu0
        %v480 = vadd.f32 %v404, %v479
        %481 = vdwg.mxu0
        %v482 = vadd.f32 %v463, %v268
        %v483 = vadd.f32 %v465, %v269
        %v484 = vadd.f32 %v468, %v270
        %v485 = vadd.f32 %v470, %v271
        %v486 = vadd.f32 %v473, %v272
        %v487 = vadd.f32 %v475, %v273
        %v488 = vadd.f32 %v478, %v274
        %v489 = vadd.f32 %v480, %v275
        %490 = vst [vmem:[%s265] sm:$0xff] %v482
        %491 = vst [vmem:[%s265 + $0x8] sm:$0xff] %v483
        %492 = vst [vmem:[%s265 + $0x10] sm:$0xff] %v484
        %493 = vst [vmem:[%s265 + $0x18] sm:$0xff] %v485
        %494 = vst [vmem:[%s265 + $0x20] sm:$0xff] %v486
        %495 = vst [vmem:[%s265 + $0x28] sm:$0xff] %v487
        %496 = vst [vmem:[%s265 + $0x30] sm:$0xff] %v488
        %497 = vst [vmem:[%s265 + $0x38] sm:$0xff] %v489
        %s498 = sand.u32 %s120, 1
        %s499 = scalar_lea.sflag [#allocation4], %s498
        %s500 = sand.u32 %s120, 1
        %s501 = smul.addr %s500, 64
        %s502 = scalar_lea.vmem [#allocation10], %s501
        // Predicated region
        $region53: #{tpu_custom_call.1} parent=35 // pred_check
          %p503 = pneg %p130
        $region54: #{tpu_custom_call.1} parent=35 // pred_check_branch
          %505 = sbr.rel (%p503) target = $region56
        $region55: #{tpu_custom_call.1} parent=35 // pred_region
          %s506 = smul.u32 8, %s23
          %508 = vsyncadd %s499, 0
          %s509 = smul.addr %s506, 8
          %s510 = scalar_lea.hbm %s4, %s509
          %s511 = sshll.u32 %s502, 4
          %s512 = int_to_ptr.vmem [resolvable:$true] %s511
          %s513 = sshll.u32 %s510, 4
          %s514 = int_to_ptr.hbm [resolvable:$true] %s513
          %519 = dma.vmem_to_hbm [thread:$0]  %s512, 1024, %s514, %s499, 128, 128, 8
        $region56: #{tpu_custom_call.1} parent=35 // pred_fallthru
          _
      $region36: #{tpu_custom_call.1} parent=5 // pred_fallthru
        _
      %p520 = scmp.le.s32.totalorder 2, %s18
      // Predicated region
      $region57: #{tpu_custom_call.1} parent=5 // pred_check
        %p521 = pneg %p520
      $region58: #{tpu_custom_call.1} parent=5 // pred_check_branch
        %523 = sbr.rel (%p521) target = $region60
      $region59: #{tpu_custom_call.1} parent=5 // pred_region
        %s524 = ssub.s32 %s18, 2
        // Predicated region
        $region61: #{tpu_custom_call.1} parent=59 // pred_check
          %p525 = pneg %p136
        $region62: #{tpu_custom_call.1} parent=59 // pred_check_branch
          %527 = sbr.rel (%p525) target = $region64
        $region63: #{tpu_custom_call.1} parent=59 // pred_region
          %s528 = sand.u32 %s121, 1
          %s529 = scalar_lea.sflag [#allocation4], %s528
          %s530 = sand.u32 %s121, 1
          %s531 = smul.addr %s530, 64
          %s532 = scalar_lea.vmem [#allocation10], %s531
          %534 = dma.done %s529, 1024
        $region64: #{tpu_custom_call.1} parent=59 // pred_fallthru
          _
      $region60: #{tpu_custom_call.1} parent=5 // pred_fallthru
        _
    $region6: #{tpu_custom_call.1} parent=1 // loop_footer
      %s22 = sadd.s32 1, %s18
    $region7: #{tpu_custom_call.1} parent=1 // loop_footer_branch
      %17 = sbr.rel target = $region3
    $region8: #{tpu_custom_call.1} parent=1 // loop_exit
      _
    %535 = vsyncpa [#allocation3], 1
    %s536 = scalar_lea.sflag [#allocation3], 1
    %537 = vsyncpa %s536, 1
    %538 = vsyncpa [#allocation6], 1
    %539 = vsyncpa [#allocation9], 1
    %540 = vsyncpa [#allocation4], 1
    %s541 = scalar_lea.sflag [#allocation4], 1
    %542 = vsyncpa %s541, 1

// kernel: tpu_custom_call.1
$region0: #{tpu_custom_call.1}
  #allocation0 [shape = 'u32[]', space=smem, size = 0x4, offset = 0x4, fixed_abs, tag = 'smem constant byte address 0x4 - core index']
  #allocation1 [shape = 'u32[72,128]{1,0:T(1,128)}', space=vmem, size = 0x9000, scoped, tag = 'internal scratch']
  %s0 = inlined_call_operand.hbm [shape: f32[256,128], index: 0, kind: input, shape index: {}]
  %s1 = inlined_call_operand.hbm [shape: bf16[128,128], index: 1, kind: input, shape index: {}]
  %s2 = inlined_call_operand.hbm [shape: f32[2,128], index: 2, kind: input, shape index: {}]
  %s3 = inlined_call_operand.hbm [shape: bf16[128,128], index: 3, kind: input, shape index: {}]
  %s4 = inlined_call_operand.hbm [shape: f32[256,128], index: 4, kind: output, shape index: {}]
  %s5 = sld [smem:[#allocation0]]
  $region65: #{tpu_custom_call.1} parent=0
    _
  %s7 = ssub.s32 1, %s5
  %s8 = scalar_select 0, %s7, %s5
  $region1: #{tpu_custom_call.1} parent=0
    #allocation2 [shape = 'u8[65536]{0}', space=vmem, size = 0x10000, scoped, tag = 'input window, operand 0']
    #allocation3 [shape = 's32[2]{0}', space=sflag, size = 0x8, scoped, tag = 'scoped memory for tpu_custom_call.1']
    #allocation4 [shape = 's32[2]{0}', space=sflag, size = 0x8, scoped, tag = 'scoped memory for tpu_custom_call.1']
    #allocation5 [shape = 'u8[32768]{0}', space=vmem, size = 0x8000, scoped, tag = 'input window, operand 1, single buffered']
    #allocation6 [shape = 's32[1]{0}', space=sflag, size = 0x4, scoped, tag = 'scoped memory for tpu_custom_call.1']
    #allocation7 [shape = 'u8[1024]{0}', space=vmem, size = 0x400, scoped, tag = 'input window, operand 2, single buffered']
    #allocation8 [shape = 'u8[32768]{0}', space=vmem, size = 0x8000, scoped, tag = 'input window, operand 3, single buffered']
    #allocation9 [shape = 's32[1]{0}', space=sflag, size = 0x4, scoped, tag = 'scoped memory for tpu_custom_call.1']
    #allocation10 [shape = 'u8[65536]{0}', space=vmem, size = 0x10000, scoped, tag = 'output window, operand 0']
    %9 = vsyncpa [#allocation3], 0
    %s10 = scalar_lea.sflag [#allocation3], 1
    %11 = vsyncpa %s10, 0
    %12 = vsyncpa [#allocation6], 0
    %13 = vsyncpa [#allocation9], 0
    %14 = vsyncpa [#allocation4], 0
    %s15 = scalar_lea.sflag [#allocation4], 1
    %16 = vsyncpa %s15, 0
    loop: start=0, step=1, limit=6
    $region2: #{tpu_custom_call.1} parent=1 // loop_pre_header
      _
    $region3: #{tpu_custom_call.1} parent=1 // loop_header
      %s18 = sphi 0, %s22
      %p19 = scmp.ge.s32.totalorder %s18, 6
      %s28 = sphi 0, %s30
      %s31 = sphi 0, %s28
      %s32 = sphi 0, %s31
      %s48 = sphi 0, %s32
      %s52 = sphi 0, %s52
      %s54 = sphi 0, %s52
      %s55 = sphi 0, %s54
      %s69 = sphi 0, %s55
      %s73 = sphi 0, %s73
      %s75 = sphi 0, %s73
      %s76 = sphi 0, %s75
      %s90 = sphi 0, %s76
      %s94 = sphi 0, %s94
      %s96 = sphi 0, %s94
      %s97 = sphi 0, %s96
      %s111 = sphi 0, %s97
      %s117 = sphi 0, %s119
      %s120 = sphi 0, %s117
      %s121 = sphi 0, %s120
      %s137 = sphi 0, %s121
    $region4: #{tpu_custom_call.1} parent=1 // loop_header_branch
      %21 = sbr.rel (%p19) target = $region8
    $region5: #{tpu_custom_call.1} parent=1 // loop_body
      %s23 = ssub.s32 %s18, 1
      %s24 = ssub.s32 %s18, 2
      %s25 = sadd.s32 %s18, 1
      %s26 = ssub.s32 %s18, %s25
      %p27 = scmp.eq.s32.totalorder %s26, 0
      %s29 = sadd.s32 %s28, 1
      %s30 = scalar_select %p27, %s28, %s29
      %p33 = pneg %p27
      %p34 = scmp.eq.s32.totalorder %s18, 3
      %p35 = por %p33, %p34
      %p36 = scmp.ne.s32.totalorder %s28, %s31
      %p37 = scmp.eq.s32.totalorder %s18, 0
      %p38 = por %p36, %p37
      %p39 = scmp.ne.s32.totalorder %s28, %s31
      %p40 = scmp.eq.s32.totalorder %s23, 3
      %p41 = por %p39, %p40
      %p42 = scmp.ne.s32.totalorder %s31, %s32
      %p43 = scmp.eq.s32.totalorder %s23, 0
      %p44 = por %p42, %p43
      %p45 = scmp.ne.s32.totalorder %s31, %s32
      %p46 = scmp.eq.s32.totalorder %s24, 3
      %p47 = por %p45, %p46
      %p49 = scmp.ne.s32.totalorder %s32, %s48
      %p50 = scmp.eq.s32.totalorder %s24, 0
      %p51 = por %p49, %p50
      %s53 = sadd.s32 %s52, 1
      %p56 = scmp.eq.s32.totalorder %s18, 3
      %p57 = scmp.ne.s32.totalorder %s52, %s54
      %p58 = scmp.eq.s32.totalorder %s18, 0
      %p59 = por %p57, %p58
      %p60 = scmp.ne.s32.totalorder %s52, %s54
      %p61 = scmp.eq.s32.totalorder %s23, 3
      %p62 = por %p60, %p61
      %p63 = scmp.ne.s32.totalorder %s54, %s55
      %p64 = scmp.eq.s32.totalorder %s23, 0
      %p65 = por %p63, %p64
      %p66 = scmp.ne.s32.totalorder %s54, %s55
      %p67 = scmp.eq.s32.totalorder %s24, 3
      %p68 = por %p66, %p67
      %p70 = scmp.ne.s32.totalorder %s55, %s69
      %p71 = scmp.eq.s32.totalorder %s24, 0
      %p72 = por %p70, %p71
      %s74 = sadd.s32 %s73, 1
      %p77 = scmp.eq.s32.totalorder %s18, 3
      %p78 = scmp.ne.s32.totalorder %s73, %s75
      %p79 = scmp.eq.s32.totalorder %s18, 0
      %p80 = por %p78, %p79
      %p81 = scmp.ne.s32.totalorder %s73, %s75
      %p82 = scmp.eq.s32.totalorder %s23, 3
      %p83 = por %p81, %p82
      %p84 = scmp.ne.s32.totalorder %s75, %s76
      %p85 = scmp.eq.s32.totalorder %s23, 0
      %p86 = por %p84, %p85
      %p87 = scmp.ne.s32.totalorder %s75, %s76
      %p88 = scmp.eq.s32.totalorder %s24, 3
      %p89 = por %p87, %p88
      %p91 = scmp.ne.s32.totalorder %s76, %s90
      %p92 = scmp.eq.s32.totalorder %s24, 0
      %p93 = por %p91, %p92
      %s95 = sadd.s32 %s94, 1
      %p98 = scmp.eq.s32.totalorder %s18, 3
      %p99 = scmp.ne.s32.totalorder %s94, %s96
      %p100 = scmp.eq.s32.totalorder %s18, 0
      %p101 = por %p99, %p100
      %p102 = scmp.ne.s32.totalorder %s94, %s96
      %p103 = scmp.eq.s32.totalorder %s23, 3
      %p104 = por %p102, %p103
      %p105 = scmp.ne.s32.totalorder %s96, %s97
      %p106 = scmp.eq.s32.totalorder %s23, 0
      %p107 = por %p105, %p106
      %p108 = scmp.ne.s32.totalorder %s96, %s97
      %p109 = scmp.eq.s32.totalorder %s24, 3
      %p110 = por %p108, %p109
      %p112 = scmp.ne.s32.totalorder %s97, %s111
      %p113 = scmp.eq.s32.totalorder %s24, 0
      %p114 = por %p112, %p113
      %s115 = ssub.s32 %s18, %s25
      %p116 = scmp.eq.s32.totalorder %s115, 0
      %s118 = sadd.s32 %s117, 1
      %s119 = scalar_select %p116, %s117, %s118
      %p122 = pneg %p116
      %p123 = scmp.eq.s32.totalorder %s18, 3
      %p124 = por %p122, %p123
      %p125 = scmp.ne.s32.totalorder %s117, %s120
      %p126 = scmp.eq.s32.totalorder %s18, 0
      %p127 = por %p125, %p126
      %p128 = scmp.ne.s32.totalorder %s117, %s120
      %p129 = scmp.eq.s32.totalorder %s23, 3
      %p130 = por %p128, %p129
      %p131 = scmp.ne.s32.totalorder %s120, %s121
      %p132 = scmp.eq.s32.totalorder %s23, 0
      %p133 = por %p131, %p132
      %p134 = scmp.ne.s32.totalorder %s120, %s121
      %p135 = scmp.eq.s32.totalorder %s24, 3
      %p136 = por %p134, %p135
      %p138 = scmp.ne.s32.totalorder %s121, %s137
      %p139 = scmp.eq.s32.totalorder %s24, 0
      %p140 = por %p138, %p139
      %p141 = scmp.le.s32.totalorder 1, %s18
      %p142 = scmp.lt.s32.totalorder %s18, 5
      %p143 = pnand %p141, %p142
      %p144 = pneg %p143
      // Predicated region
      $region9: #{tpu_custom_call.1} parent=5 // pred_check
        _
      $region10: #{tpu_custom_call.1} parent=5 // pred_check_branch
        %146 = sbr.rel (%p143) target = $region12
      $region11: #{tpu_custom_call.1} parent=5 // pred_region
        %s147 = ssub.s32 %s18, 1
        // Predicated region
        $region13: #{tpu_custom_call.1} parent=11 // pred_check
          %p148 = pneg %p65
        $region14: #{tpu_custom_call.1} parent=11 // pred_check_branch
          %150 = sbr.rel (%p148) target = $region16
        $region15: #{tpu_custom_call.1} parent=11 // pred_region
          %152 = vsyncadd [#allocation6], 0
          %s153 = sshll.u32 %s1, 4
          %s154 = int_to_ptr.hbm [resolvable:$true] %s153
          %s155 = sshll.u32 [#allocation5], 4
          %s156 = int_to_ptr.vmem [resolvable:$true] %s155
          %161 = dma.hbm_to_vmem [thread:$0]  %s154, 1024, %s156, [#allocation6], 64, 64, 4
        $region16: #{tpu_custom_call.1} parent=11 // pred_fallthru
          _
        // Predicated region
        $region17: #{tpu_custom_call.1} parent=11 // pred_check
          %p162 = pneg %p86
        $region18: #{tpu_custom_call.1} parent=11 // pred_check_branch
          %164 = sbr.rel (%p162) target = $region20
        $region19: #{tpu_custom_call.1} parent=11 // pred_region
          %166 = vsyncadd [#allocation6], 0
          %s168 = sshll.u32 %s2, 4
          %s169 = int_to_ptr.hbm [resolvable:$true] %s168
          %s170 = sshll.u32 [#allocation7], 4
          %s171 = int_to_ptr.vmem [resolvable:$true] %s170
          %173 = dma.hbm_to_vmem [thread:$0]  %s169, 32, %s171, [#allocation6]
        $region20: #{tpu_custom_call.1} parent=11 // pred_fallthru
          _
        // Predicated region
        $region21: #{tpu_custom_call.1} parent=11 // pred_check
          %p174 = pneg %p107
        $region22: #{tpu_custom_call.1} parent=11 // pred_check_branch
          %176 = sbr.rel (%p174) target = $region24
        $region23: #{tpu_custom_call.1} parent=11 // pred_region
          %178 = vsyncadd [#allocation9], 0
          %s179 = sshll.u32 %s3, 4
          %s180 = int_to_ptr.hbm [resolvable:$true] %s179
          %s181 = sshll.u32 [#allocation8], 4
          %s182 = int_to_ptr.vmem [resolvable:$true] %s181
          %187 = dma.hbm_to_vmem [thread:$0]  %s180, 1024, %s182, [#allocation9], 64, 64, 4
        $region24: #{tpu_custom_call.1} parent=11 // pred_fallthru
          _
      $region12: #{tpu_custom_call.1} parent=5 // pred_fallthru
        _
      %p188 = scmp.lt.s32.totalorder %s18, 4
      // Predicated region
      $region25: #{tpu_custom_call.1} parent=5 // pred_check
        %p189 = pneg %p188
      $region26: #{tpu_custom_call.1} parent=5 // pred_check_branch
        %191 = sbr.rel (%p189) target = $region28
      $region27: #{tpu_custom_call.1} parent=5 // pred_region
        // Predicated region
        $region29: #{tpu_custom_call.1} parent=27 // pred_check
          %p192 = pneg %p38
        $region30: #{tpu_custom_call.1} parent=27 // pred_check_branch
          %194 = sbr.rel (%p192) target = $region32
        $region31: #{tpu_custom_call.1} parent=27 // pred_region
          %s195 = sand.u32 %s28, 1
          %s196 = scalar_lea.sflag [#allocation3], %s195
          %s197 = sand.u32 %s28, 1
          %s198 = smul.addr %s197, 64
          %s199 = scalar_lea.vmem [#allocation2], %s198
          %s200 = smul.u32 8, %s18
          %202 = vsyncadd %s196, 0
          %s203 = smul.addr %s200, 8
          %s204 = scalar_lea.hbm %s0, %s203
          %s205 = sshll.u32 %s204, 4
          %s206 = int_to_ptr.hbm [resolvable:$true] %s205
          %s207 = sshll.u32 %s199, 4
          %s208 = int_to_ptr.vmem [resolvable:$true] %s207
          %213 = dma.hbm_to_vmem [thread:$0]  %s206, 1024, %s208, %s196, 128, 128, 8
        $region32: #{tpu_custom_call.1} parent=27 // pred_fallthru
          _
      $region28: #{tpu_custom_call.1} parent=5 // pred_fallthru
        _
      %p214 = scmp.le.s32.totalorder 1, %s18
      %p215 = scmp.lt.s32.totalorder %s18, 5
      %p216 = pnand %p214, %p215
      %p217 = pneg %p216
      // Predicated region
      $region33: #{tpu_custom_call.1} parent=5 // pred_check
        _
      $region34: #{tpu_custom_call.1} parent=5 // pred_check_branch
        %219 = sbr.rel (%p216) target = $region36
      $region35: #{tpu_custom_call.1} parent=5 // pred_region
        %s220 = ssub.s32 %s18, 1
        %s221 = sand.u32 %s31, 1
        %s222 = scalar_lea.sflag [#allocation3], %s221
        %s223 = sand.u32 %s31, 1
        %s224 = smul.addr %s223, 64
        %s225 = scalar_lea.vmem [#allocation2], %s224
        // Predicated region
        $region37: #{tpu_custom_call.1} parent=35 // pred_check
          %p226 = pneg %p44
        $region38: #{tpu_custom_call.1} parent=35 // pred_check_branch
          %228 = sbr.rel (%p226) target = $region40
        $region39: #{tpu_custom_call.1} parent=35 // pred_region
          %230 = dma.done %s222, 1024
        $region40: #{tpu_custom_call.1} parent=35 // pred_fallthru
          _
        // Predicated region
        $region41: #{tpu_custom_call.1} parent=35 // pred_check
          %p231 = pneg %p65
        $region42: #{tpu_custom_call.1} parent=35 // pred_check_branch
          %233 = sbr.rel (%p231) target = $region44
        $region43: #{tpu_custom_call.1} parent=35 // pred_region
          %235 = dma.done [#allocation6], 1024
        $region44: #{tpu_custom_call.1} parent=35 // pred_fallthru
          _
        // Predicated region
        $region45: #{tpu_custom_call.1} parent=35 // pred_check
          %p236 = pneg %p86
        $region46: #{tpu_custom_call.1} parent=35 // pred_check_branch
          %238 = sbr.rel (%p236) target = $region48
        $region47: #{tpu_custom_call.1} parent=35 // pred_region
          %240 = dma.done [#allocation6], 32
        $region48: #{tpu_custom_call.1} parent=35 // pred_fallthru
          _
        // Predicated region
        $region49: #{tpu_custom_call.1} parent=35 // pred_check
          %p241 = pneg %p107
        $region50: #{tpu_custom_call.1} parent=35 // pred_check_branch
          %243 = sbr.rel (%p241) target = $region52
        $region51: #{tpu_custom_call.1} parent=35 // pred_region
          %245 = dma.done [#allocation9], 1024
        $region52: #{tpu_custom_call.1} parent=35 // pred_fallthru
          _
        %s246 = sand.u32 %s31, 1
        %s247 = scalar_lea.sflag [#allocation3], %s246
        %s248 = sand.u32 %s31, 1
        %s249 = smul.addr %s248, 64
        %s250 = scalar_lea.vmem [#allocation2], %s249
        %p251 = pneg %p44
        %p252 = pneg %p41
        %p253 = pneg %p65
        %p254 = pneg %p62
        %p255 = pneg %p86
        %p256 = pneg %p83
        %p257 = pneg %p107
        %p258 = pneg %p104
        %p259 = pneg %p133
        %p260 = pneg %p130
        %s261 = sand.u32 %s120, 1
        %s262 = scalar_lea.sflag [#allocation4], %s261
        %s263 = sand.u32 %s120, 1
        %s264 = smul.addr %s263, 64
        %s265 = scalar_lea.vmem [#allocation10], %s264
        %s266 = smul.u32 8, %s23
        %s267 = smul.u32 8, %s23
        %v268 = vld [vmem:[%s225] sm:$0xff]
        %v269 = vld [vmem:[%s225 + $0x8] sm:$0xff]
        %v270 = vld [vmem:[%s225 + $0x10] sm:$0xff]
        %v271 = vld [vmem:[%s225 + $0x18] sm:$0xff]
        %v272 = vld [vmem:[%s225 + $0x20] sm:$0xff]
        %v273 = vld [vmem:[%s225 + $0x28] sm:$0xff]
        %v274 = vld [vmem:[%s225 + $0x30] sm:$0xff]
        %v275 = vld [vmem:[%s225 + $0x38] sm:$0xff]
        %v276 = vpack.c.bf16 %v269, %v268
        %v277 = vpack.c.bf16 %v271, %v270
        %v278 = vpack.c.bf16 %v273, %v272
        %v279 = vpack.c.bf16 %v275, %v274
        %v280 = vld [vmem:[#allocation5] sm:$0xf]
        %v281 = vld [vmem:[#allocation5 + $0x4] sm:$0xf]
        %v282 = vld [vmem:[#allocation5 + $0x8] sm:$0xf]
        %v283 = vld [vmem:[#allocation5 + $0xc] sm:$0xf]
        %v284 = vld [vmem:[#allocation5 + $0x10] sm:$0xf]
        %v285 = vld [vmem:[#allocation5 + $0x14] sm:$0xf]
        %v286 = vld [vmem:[#allocation5 + $0x18] sm:$0xf]
        %v287 = vld [vmem:[#allocation5 + $0x1c] sm:$0xf]
        %v288 = vld [vmem:[#allocation5 + $0x20] sm:$0xf]
        %v289 = vld [vmem:[#allocation5 + $0x24] sm:$0xf]
        %v290 = vld [vmem:[#allocation5 + $0x28] sm:$0xf]
        %v291 = vld [vmem:[#allocation5 + $0x2c] sm:$0xf]
        %v292 = vld [vmem:[#allocation5 + $0x30] sm:$0xf]
        %v293 = vld [vmem:[#allocation5 + $0x34] sm:$0xf]
        %v294 = vld [vmem:[#allocation5 + $0x38] sm:$0xf]
        %v295 = vld [vmem:[#allocation5 + $0x3c] sm:$0xf]
        %v296 = vld [vmem:[#allocation7] sm:$0x1]
        %v297 = vperm.slane %v296, 0
        %v314 = vunpack.c.l.b16 %v280
        %v315 = vunpack.c.l.b16 %v281
        %v316 = vunpack.c.l.b16 %v282
        %v317 = vunpack.c.l.b16 %v283
        %v318 = vunpack.c.l.b16 %v284
        %v319 = vunpack.c.l.b16 %v285
        %v320 = vunpack.c.l.b16 %v286
        %v321 = vunpack.c.l.b16 %v287
        %v322 = vunpack.c.l.b16 %v288
        %v323 = vunpack.c.l.b16 %v289
        %v324 = vunpack.c.l.b16 %v290
        %v325 = vunpack.c.l.b16 %v291
        %v326 = vunpack.c.l.b16 %v292
        %v327 = vunpack.c.l.b16 %v293
        %v328 = vunpack.c.l.b16 %v294
        %v329 = vunpack.c.l.b16 %v295
        %v330 = vpack.c.b16 %v315, %v314
        %v331 = vpack.c.b16 %v317, %v316
        %v332 = vpack.c.b16 %v319, %v318
        %v333 = vpack.c.b16 %v321, %v320
        %v334 = vpack.c.b16 %v323, %v322
        %v335 = vpack.c.b16 %v325, %v324
        %v336 = vpack.c.b16 %v327, %v326
        %v337 = vpack.c.b16 %v329, %v328
        %346 = vmatpush.bf16.msra.mxu0 %v337
        %347 = vmatpush.bf16.msra.mxu0 %v336
        %348 = vmatpush.bf16.msra.mxu0 %v335
        %349 = vmatpush.bf16.msra.mxu0 %v334
        %350 = vmatpush.bf16.msra.mxu0 %v333
        %351 = vmatpush.bf16.msra.mxu0 %v332
        %352 = vmatpush.bf16.msra.mxu0 %v331
        %353 = vmatpush.bf16.msra.mxu0 %v330
        %354 = vmatmul.bf16.gmra.mxu0 %v276
        %v355 = vpop.f32.mrf.mxu0
        %v356 = vadd.f32 %v297, %v355
        %v357 = vpop.f32.mrf.mxu0
        %v358 = vadd.f32 %v297, %v357
        %359 = vmatmul.bf16.gmra.mxu0 %v277
        %v360 = vpop.f32.mrf.mxu0
        %v361 = vadd.f32 %v297, %v360
        %v362 = vpop.f32.mrf.mxu0
        %v363 = vadd.f32 %v297, %v362
        %364 = vmatmul.bf16.gmra.mxu0 %v278
        %v365 = vpop.f32.mrf.mxu0
        %v366 = vadd.f32 %v297, %v365
        %v367 = vpop.f32.mrf.mxu0
        %v368 = vadd.f32 %v297, %v367
        %369 = vmatmul.bf16.gmra.mxu0 %v279
        %v370 = vpop.f32.mrf.mxu0
        %v371 = vadd.f32 %v297, %v370
        %v372 = vpop.f32.mrf.mxu0
        %v373 = vadd.f32 %v297, %v372
        %374 = vdwg.mxu0
        %v375 = vmax.f32 %v356, 0.0
        %v376 = vmax.f32 %v358, 0.0
        %v377 = vmax.f32 %v361, 0.0
        %v378 = vmax.f32 %v363, 0.0
        %v379 = vmax.f32 %v366, 0.0
        %v380 = vmax.f32 %v368, 0.0
        %v381 = vmax.f32 %v371, 0.0
        %v382 = vmax.f32 %v373, 0.0
        %v383 = vpack.c.bf16 %v376, %v375
        %v384 = vpack.c.bf16 %v378, %v377
        %v385 = vpack.c.bf16 %v380, %v379
        %v386 = vpack.c.bf16 %v382, %v381
        %v387 = vld [vmem:[#allocation8] sm:$0xf]
        %v388 = vld [vmem:[#allocation8 + $0x4] sm:$0xf]
        %v389 = vld [vmem:[#allocation8 + $0x8] sm:$0xf]
        %v390 = vld [vmem:[#allocation8 + $0xc] sm:$0xf]
        %v391 = vld [vmem:[#allocation8 + $0x10] sm:$0xf]
        %v392 = vld [vmem:[#allocation8 + $0x14] sm:$0xf]
        %v393 = vld [vmem:[#allocation8 + $0x18] sm:$0xf]
        %v394 = vld [vmem:[#allocation8 + $0x1c] sm:$0xf]
        %v395 = vld [vmem:[#allocation8 + $0x20] sm:$0xf]
        %v396 = vld [vmem:[#allocation8 + $0x24] sm:$0xf]
        %v397 = vld [vmem:[#allocation8 + $0x28] sm:$0xf]
        %v398 = vld [vmem:[#allocation8 + $0x2c] sm:$0xf]
        %v399 = vld [vmem:[#allocation8 + $0x30] sm:$0xf]
        %v400 = vld [vmem:[#allocation8 + $0x34] sm:$0xf]
        %v401 = vld [vmem:[#allocation8 + $0x38] sm:$0xf]
        %v402 = vld [vmem:[#allocation8 + $0x3c] sm:$0xf]
        %v403 = vld [vmem:[#allocation7 + $0x1] sm:$0x1]
        %v404 = vperm.slane %v403, 0
        %v421 = vunpack.c.l.b16 %v387
        %v422 = vunpack.c.l.b16 %v388
        %v423 = vunpack.c.l.b16 %v389
        %v424 = vunpack.c.l.b16 %v390
        %v425 = vunpack.c.l.b16 %v391
        %v426 = vunpack.c.l.b16 %v392
        %v427 = vunpack.c.l.b16 %v393
        %v428 = vunpack.c.l.b16 %v394
        %v429 = vunpack.c.l.b16 %v395
        %v430 = vunpack.c.l.b16 %v396
        %v431 = vunpack.c.l.b16 %v397
        %v432 = vunpack.c.l.b16 %v398
        %v433 = vunpack.c.l.b16 %v399
        %v434 = vunpack.c.l.b16 %v400
        %v435 = vunpack.c.l.b16 %v401
        %v436 = vunpack.c.l.b16 %v402
        %v437 = vpack.c.b16 %v422, %v421
        %v438 = vpack.c.b16 %v424, %v423
        %v439 = vpack.c.b16 %v426, %v425
        %v440 = vpack.c.b16 %v428, %v427
        %v441 = vpack.c.b16 %v430, %v429
        %v442 = vpack.c.b16 %v432, %v431
        %v443 = vpack.c.b16 %v434, %v433
        %v444 = vpack.c.b16 %v436, %v435
        %453 = vmatpush.bf16.msra.mxu0 %v444
        %454 = vmatpush.bf16.msra.mxu0 %v443
        %455 = vmatpush.bf16.msra.mxu0 %v442
        %456 = vmatpush.bf16.msra.mxu0 %v441
        %457 = vmatpush.bf16.msra.mxu0 %v440
        %458 = vmatpush.bf16.msra.mxu0 %v439
        %459 = vmatpush.bf16.msra.mxu0 %v438
        %460 = vmatpush.bf16.msra.mxu0 %v437
        %461 = vmatmul.bf16.gmra.mxu0 %v383
        %v462 = vpop.f32.mrf.mxu0
        %v463 = vadd.f32 %v404, %v462
        %v464 = vpop.f32.mrf.mxu0
        %v465 = vadd.f32 %v404, %v464
        %466 = vmatmul.bf16.gmra.mxu0 %v384
        %v467 = vpop.f32.mrf.mxu0
        %v468 = vadd.f32 %v404, %v467
        %v469 = vpop.f32.mrf.mxu0
        %v470 = vadd.f32 %v404, %v469
        %471 = vmatmul.bf16.gmra.mxu0 %v385
        %v472 = vpop.f32.mrf.mxu0
        %v473 = vadd.f32 %v404, %v472
        %v474 = vpop.f32.mrf.mxu0
        %v475 = vadd.f32 %v404, %v474
        %476 = vmatmul.bf16.gmra.mxu0 %v386
        %v477 = vpop.f32.mrf.mxu0
        %v478 = vadd.f32 %v404, %v477
        %v479 = vpop.f32.mrf.mxu0
        %v480 = vadd.f32 %v404, %v479
        %481 = vdwg.mxu0
        %v482 = vadd.f32 %v463, %v268
        %v483 = vadd.f32 %v465, %v269
        %v484 = vadd.f32 %v468, %v270
        %v485 = vadd.f32 %v470, %v271
        %v486 = vadd.f32 %v473, %v272
        %v487 = vadd.f32 %v475, %v273
        %v488 = vadd.f32 %v478, %v274
        %v489 = vadd.f32 %v480, %v275
        %490 = vst [vmem:[%s265] sm:$0xff] %v482
        %491 = vst [vmem:[%s265 + $0x8] sm:$0xff] %v483
        %492 = vst [vmem:[%s265 + $0x10] sm:$0xff] %v484
        %493 = vst [vmem:[%s265 + $0x18] sm:$0xff] %v485
        %494 = vst [vmem:[%s265 + $0x20] sm:$0xff] %v486
        %495 = vst [vmem:[%s265 + $0x28] sm:$0xff] %v487
        %496 = vst [vmem:[%s265 + $0x30] sm:$0xff] %v488
        %497 = vst [vmem:[%s265 + $0x38] sm:$0xff] %v489
        %s498 = sand.u32 %s120, 1
        %s499 = scalar_lea.sflag [#allocation4], %s498
        %s500 = sand.u32 %s120, 1
        %s501 = smul.addr %s500, 64
        %s502 = scalar_lea.vmem [#allocation10], %s501
        // Predicated region
        $region53: #{tpu_custom_call.1} parent=35 // pred_check
          %p503 = pneg %p130
        $region54: #{tpu_custom_call.1} parent=35 // pred_check_branch
          %505 = sbr.rel (%p503) target = $region56
        $region55: #{tpu_custom_call.1} parent=35 // pred_region
          %s506 = smul.u32 8, %s23
          %508 = vsyncadd %s499, 0
          %s509 = smul.addr %s506, 8
          %s510 = scalar_lea.hbm %s4, %s509
          %s511 = sshll.u32 %s502, 4
          %s512 = int_to_ptr.vmem [resolvable:$true] %s511
          %s513 = sshll.u32 %s510, 4
          %s514 = int_to_ptr.hbm [resolvable:$true] %s513
          %519 = dma.vmem_to_hbm [thread:$0]  %s512, 1024, %s514, %s499, 128, 128, 8
        $region56: #{tpu_custom_call.1} parent=35 // pred_fallthru
          _
      $region36: #{tpu_custom_call.1} parent=5 // pred_fallthru
        _
      %p520 = scmp.le.s32.totalorder 2, %s18
      // Predicated region
      $region57: #{tpu_custom_call.1} parent=5 // pred_check
        %p521 = pneg %p520
      $region58: #{tpu_custom_call.1} parent=5 // pred_check_branch
        %523 = sbr.rel (%p521) target = $region60
      $region59: #{tpu_custom_call.1} parent=5 // pred_region
        %s524 = ssub.s32 %s18, 2
        // Predicated region
        $region61: #{tpu_custom_call.1} parent=59 // pred_check
          %p525 = pneg %p136
        $region62: #{tpu_custom_call.1} parent=59 // pred_check_branch
          %527 = sbr.rel (%p525) target = $region64
        $region63: #{tpu_custom_call.1} parent=59 // pred_region
          %s528 = sand.u32 %s121, 1
          %s529 = scalar_lea.sflag [#allocation4], %s528
          %s530 = sand.u32 %s121, 1
          %s531 = smul.addr %s530, 64
          %s532 = scalar_lea.vmem [#allocation10], %s531
          %534 = dma.done %s529, 1024
        $region64: #{tpu_custom_call.1} parent=59 // pred_fallthru
          _
      $region60: #{tpu_custom_call.1} parent=5 // pred_fallthru
        _
    $region6: #{tpu_custom_call.1} parent=1 // loop_footer
      %s22 = sadd.s32 1, %s18
    $region7: #{tpu_custom_call.1} parent=1 // loop_footer_branch
      %17 = sbr.rel target = $region3
    $region8: #{tpu_custom_call.1} parent=1 // loop_exit
      _
    %535 = vsyncpa [#allocation3], 1
    %s536 = scalar_lea.sflag [#allocation3], 1
    %537 = vsyncpa %s536, 1
    %538 = vsyncpa [#allocation6], 1
    %539 = vsyncpa [#allocation9], 1
    %540 = vsyncpa [#allocation4], 1
    %s541 = scalar_lea.sflag [#allocation4], 1
    %542 = vsyncpa %s541, 1

</llo_original>
